<compile_context>
chip_gen: v5e
topology: v5e:2x2
jax: 0.10.0
libtpu: 0.0.40
codegen_flags: <defaults>
</compile_context>

<pallas_src>
import functools

import jax
import jax.numpy as jnp
from jax.experimental import pallas as pl
from jax.experimental.pallas import tpu as pltpu


def _round_up(v, m):
    return ((v + m - 1) // m) * m


def _im2col_3x3(x):
    """x: (B, Cin, H, W) NCHW -> patches (B, H*W, Cin*9), 'same' padding, stride 1."""
    B, Cin, H, W = x.shape
    xp = jnp.pad(x, ((0, 0), (0, 0), (1, 1), (1, 1)))
    shifts = [xp[:, :, kh:kh + H, kw:kw + W] for kh in range(3) for kw in range(3)]
    patches = jnp.stack(shifts, axis=2)            # (B, Cin, 9, H, W)
    patches = patches.reshape(B, Cin * 9, H * W)   # (Cin, kh, kw) flattened -> matches conv_w reshape
    return patches.transpose(0, 2, 1)              # (B, HW, Cin*9)


# ----------------------------------------------------------------------------
# Fused kernel.
#   Grid: (B, n_row_tiles); row-tile (reduction) axis is last, marked "arbitrary".
#   patches_ref : (TILE_ROWS, KKC_PAD)  bf16  (ones column carries the conv bias)
#   wconv_ref   : (KKC_PAD, COUT_PAD)   bf16  (row KKC = conv bias)
#   fc1_ref     : (COUT_PAD, F_PAD)     f32   (row COUT_PAD-1 = fc1 bias)
#   cls_ref     : (F_PAD, N_PAD)        f32   (row F_PAD-1 = classifier bias)
#   out_ref     : (1, 1, N_PAD)         f32   (one lane-dense row per batch element)
#   acc_ref     : (1, COUT_PAD)         f32   VMEM scratch: running spatial sum (avg-pool)
# ----------------------------------------------------------------------------
def _fused_cnn_kernel(patches_ref, wconv_ref, fc1_ref, cls_ref, out_ref, acc_ref,
                      *, inv_hw, cout_pad, f_pad):
    t = pl.program_id(1)

    @pl.when(t == 0)
    def _init():
        acc_ref[...] = jnp.zeros_like(acc_ref)

    # Conv tile as a single 2-D MXU matmul (bf16 inputs, f32 accumulation).
    conv = jnp.dot(patches_ref[...], wconv_ref[...],
                   preferred_element_type=jnp.float32)          # (TILE_ROWS, COUT_PAD)
    conv = jnp.maximum(conv, 0.0)                               # ReLU in f32 (VPU)
    acc_ref[...] += jnp.sum(conv, axis=0, keepdims=True)        # partial global-avg-pool sum

    @pl.when(t == pl.num_programs(1) - 1)
    def _finalize():
        pooled = acc_ref[...] * inv_hw                          # (1, COUT_PAD) f32
        # Bias lanes: last padded channel / feature is set to 1.0 so fc1/cls biases
        # (stored as the last row of the padded weights) come out of the same matmul.
        ch = jax.lax.broadcasted_iota(jnp.int32, pooled.shape, 1)
        pooled = jnp.where(ch == cout_pad - 1, 1.0, pooled)
        feats = jnp.dot(pooled, fc1_ref[...],
                        preferred_element_type=jnp.float32)     # "model(x)" -> (1, F_PAD)
        feats = jnp.maximum(feats, 0.0)                         # self.relu(self.model(x))
        fi = jax.lax.broadcasted_iota(jnp.int32, feats.shape, 1)
        feats = jnp.where(fi == f_pad - 1, 1.0, feats)
        out_ref[0] = jnp.dot(feats, cls_ref[...],
                             preferred_element_type=jnp.float32)  # classification -> (1, N_PAD)


def cnn_forward(x, params, *, tile_rows=128):
    """Full forward of the CNN module (stand-in backbone + exact head).

    x: (B, Cin, H, W) float32 (NCHW, like PyTorch).  Returns logits (B, N) float32.
    """
    B, Cin, H, W = x.shape
    conv_w, conv_b = params["conv_w"], params["conv_b"]
    fc1_w, fc1_b = params["fc1_w"], params["fc1_b"]
    cls_w, cls_b = params["cls_w"], params["cls_b"]

    Cout = conv_w.shape[0]
    F = fc1_w.shape[0]            # 1000 backbone features
    N = cls_w.shape[0]            # classes
    HW = H * W
    KKC = Cin * 9

    if HW % tile_rows != 0:       # fall back to one tile per image for odd sizes
        tile_rows = HW
    n_tiles = HW // tile_rows

    # Lane-dense padded sizes.
    KKC_PAD = _round_up(KKC + 1, 32)        # +1: ones column carrying the conv bias
    COUT_PAD = _round_up(Cout + 1, 128)     # +1: bias lane feeding fc1_b
    F_PAD = _round_up(F + 1, 128)           # +1: bias lane feeding cls_b
    N_PAD = _round_up(N, 128)

    # im2col in the wrapper, flattened to one (B*HW, K) operand, bf16 for the MXU.
    patches = _im2col_3x3(x).reshape(B * HW, KKC)
    patches = jnp.concatenate([patches, jnp.ones((B * HW, 1), patches.dtype)], axis=1)
    patches = jnp.pad(patches, ((0, 0), (0, KKC_PAD - KKC - 1))).astype(jnp.bfloat16)

    # Conv weight (+ bias row), bf16.
    wconv = jnp.zeros((KKC_PAD, COUT_PAD), jnp.float32)
    wconv = wconv.at[:KKC, :Cout].set(conv_w.reshape(Cout, KKC).T)
    wconv = wconv.at[KKC, :Cout].set(conv_b)
    wconv = wconv.astype(jnp.bfloat16)

    # Backbone final linear (Cout -> 1000), bias in the last padded channel row; f32.
    fc1 = jnp.zeros((COUT_PAD, F_PAD), jnp.float32)
    fc1 = fc1.at[:Cout, :F].set(fc1_w.T)
    fc1 = fc1.at[COUT_PAD - 1, :F].set(fc1_b)

    # Classifier (1000 -> N), bias in the last padded feature row; f32.
    cls = jnp.zeros((F_PAD, N_PAD), jnp.float32)
    cls = cls.at[:F, :N].set(cls_w.T)
    cls = cls.at[F_PAD - 1, :N].set(cls_b)

    kernel = functools.partial(_fused_cnn_kernel, inv_hw=1.0 / HW,
                               cout_pad=COUT_PAD, f_pad=F_PAD)

    out = pl.pallas_call(
        kernel,
        out_shape=jax.ShapeDtypeStruct((B, 1, N_PAD), jnp.float32),
        grid_spec=pltpu.PrefetchScalarGridSpec(
            num_scalar_prefetch=0,
            grid=(B, n_tiles),
            in_specs=[
                pl.BlockSpec((tile_rows, KKC_PAD), lambda b, t: (b * n_tiles + t, 0)),
                pl.BlockSpec((KKC_PAD, COUT_PAD), lambda b, t: (0, 0)),
                pl.BlockSpec((COUT_PAD, F_PAD), lambda b, t: (0, 0)),
                pl.BlockSpec((F_PAD, N_PAD), lambda b, t: (0, 0)),
            ],
            out_specs=pl.BlockSpec((1, 1, N_PAD), lambda b, t: (b, 0, 0)),
            scratch_shapes=[pltpu.VMEM((1, COUT_PAD), jnp.float32)],
        ),
        compiler_params=pltpu.CompilerParams(
            dimension_semantics=("parallel", "arbitrary")),
    )(patches, wconv, fc1, cls)

    return out[:, 0, :N]


def make_params(key, cin, cout, n_feats, n_classes):
    ks = jax.random.split(key, 6)
    s = 0.05
    return {
        "conv_w": s * jax.random.normal(ks[0], (cout, cin, 3, 3), jnp.float32),
        "conv_b": s * jax.random.normal(ks[1], (cout,), jnp.float32),
        "fc1_w":  s * jax.random.normal(ks[2], (n_feats, cout), jnp.float32),      # torch (out, in)
        "fc1_b":  s * jax.random.normal(ks[3], (n_feats,), jnp.float32),
        "cls_w":  s * jax.random.normal(ks[4], (n_classes, n_feats), jnp.float32),  # nn.Linear(1000, N).weight
        "cls_b":  s * jax.random.normal(ks[5], (n_classes,), jnp.float32),
    }


def cnn_forward_ref(x, params):
    """Pure-jnp reference with the same numerics (bf16 conv matmul, f32 everything else)."""
    Cout = params["conv_w"].shape[0]
    patches = _im2col_3x3(x)
    w = params["conv_w"].reshape(Cout, -1).T
    conv = jnp.einsum("bpk,kc->bpc",
                      patches.astype(jnp.bfloat16), w.astype(jnp.bfloat16),
                      preferred_element_type=jnp.float32)
    conv = conv + params["conv_b"].astype(jnp.bfloat16).astype(jnp.float32)
    conv = jnp.maximum(conv, 0.0)
    pooled = jnp.mean(conv, axis=1)
    feats = pooled @ params["fc1_w"].T + params["fc1_b"]
    feats = jnp.maximum(feats, 0.0)
    return feats @ params["cls_w"].T + params["cls_b"]


if __name__ == "__main__":
    key = jax.random.PRNGKey(0)
    kx, kp = jax.random.split(key)

    B, Cin, H, W = 2, 3, 16, 16        # small NCHW image batch
    Cout, N_FEATS, N_CLASSES = 8, 1000, 10

    x = jax.random.normal(kx, (B, Cin, H, W), jnp.float32)
    params = make_params(kp, Cin, Cout, N_FEATS, N_CLASSES)

    logits = jax.jit(cnn_forward)(x, params)
    logits = jax.block_until_ready(logits)

    ref = cnn_forward_ref(x, params)
    assert logits.shape == (B, N_CLASSES)
    max_err = float(jnp.max(jnp.abs(logits - ref)))
    assert jnp.allclose(logits, ref, atol=3e-3, rtol=3e-3), \
        f"Pallas output mismatch vs reference (max abs err {max_err})"

    print("KERNEL_OK")
</pallas_src>

<mosaic_0001>
module attributes {stable_mosaic.version = 11 : i64} {
  func.func @_fused_cnn_kernel(%arg0: i32, %arg1: i32, %arg2: memref<128x32xbf16, #tpu.memory_space<vmem>>, %arg3: memref<32x128xbf16, #tpu.memory_space<vmem>>, %arg4: memref<128x1024xf32, #tpu.memory_space<vmem>>, %arg5: memref<1024x128xf32, #tpu.memory_space<vmem>>, %arg6: memref<1x1x128xf32, #tpu.memory_space<vmem>>, %arg7: memref<1x128xf32, #tpu.memory_space<vmem>>) attributes {dimension_semantics = [#tpu.dimension_semantics<parallel>, #tpu.dimension_semantics<arbitrary>], iteration_bounds = array<i64: 2, 2>, scalar_prefetch = 0 : i64, scratch_operands = 1 : i64, tpu.core_type = #tpu.core_type<tc>, window_params = [{transform_indices = @transform_0, window_bounds = array<i64: 128, 32>}, {pipeline_mode = #tpu.pipeline_mode<synchronous>, transform_indices = @transform_1, window_bounds = array<i64: 32, 128>}, {pipeline_mode = #tpu.pipeline_mode<synchronous>, transform_indices = @transform_2, window_bounds = array<i64: 128, 1024>}, {pipeline_mode = #tpu.pipeline_mode<synchronous>, transform_indices = @transform_3, window_bounds = array<i64: 1024, 128>}, {transform_indices = @transform_4, window_bounds = array<i64: 1, 1, 128>}]} {
    %c0_i32 = arith.constant 0 : i32
    %0 = arith.cmpi eq, %arg1, %c0_i32 : i32
    %1 = arith.extui %0 : i1 to i32
    %c0_i32_0 = arith.constant 0 : i32
    %2 = arith.cmpi ne, %1, %c0_i32_0 : i32
    scf.if %2 {
      %cst_11 = arith.constant 0.000000e+00 : f32
      %16 = vector.broadcast %cst_11 : f32 to vector<1x128xf32>
      %c0_12 = arith.constant 0 : index
      %c0_13 = arith.constant 0 : index
      %17 = vector.load %arg7[%c0_12, %c0_13] : memref<1x128xf32, #tpu.memory_space<vmem>>, vector<1x128xf32>
      tpu.vector_store %arg7[%c0_12, %c0_13], %16 {strides = array<i32>} : memref<1x128xf32, #tpu.memory_space<vmem>>, vector<1x128xf32>,
    } else {
    }
    %c0 = arith.constant 0 : index
    %c0_1 = arith.constant 0 : index
    %3 = vector.load %arg2[%c0, %c0_1] : memref<128x32xbf16, #tpu.memory_space<vmem>>, vector<128x32xbf16>
    %c0_2 = arith.constant 0 : index
    %c0_3 = arith.constant 0 : index
    %4 = vector.load %arg3[%c0_2, %c0_3] : memref<32x128xbf16, #tpu.memory_space<vmem>>, vector<32x128xbf16>
    %cst = arith.constant dense<0.000000e+00> : vector<128x128xf32>
    %5 = tpu.matmul %3, %4, %cst {dimension_numbers = #tpu.dot_dimension_numbers<[1], [0], [0], [1], [0, 0, 1, 1], [], []>} : vector<128x32xbf16>, vector<32x128xbf16>, vector<128x128xf32> -> vector<128x128xf32>
    %cst_4 = arith.constant 0.000000e+00 : f32
    %6 = vector.broadcast %cst_4 : f32 to vector<128x128xf32>
    %7 = arith.maximumf %5, %6 : vector<128x128xf32>
    %c0_5 = arith.constant 0 : index
    %c0_6 = arith.constant 0 : index
    %8 = vector.load %arg7[%c0_5, %c0_6] : memref<1x128xf32, #tpu.memory_space<vmem>>, vector<1x128xf32>
    %cst_7 = arith.constant dense<0.000000e+00> : vector<128xf32>
    %9 = vector.multi_reduction <add>, %7, %cst_7 [0] : vector<128x128xf32> to vector<128xf32>
    %10 = vector.shape_cast %9 : vector<128xf32> to vector<1x128xf32>
    %11 = arith.addf %8, %10 : vector<1x128xf32>
    %c0_8 = arith.constant 0 : index
    %c0_9 = arith.constant 0 : index
    %12 = vector.load %arg7[%c0_8, %c0_9] : memref<1x128xf32, #tpu.memory_space<vmem>>, vector<1x128xf32>
    tpu.vector_store %arg7[%c0_8, %c0_9], %11 {strides = array<i32>} : memref<1x128xf32, #tpu.memory_space<vmem>>, vector<1x128xf32>,
    %c1_i32 = arith.constant 1 : i32
    %13 = arith.cmpi eq, %arg1, %c1_i32 : i32
    %14 = arith.extui %13 : i1 to i32
    %c0_i32_10 = arith.constant 0 : i32
    %15 = arith.cmpi ne, %14, %c0_i32_10 : i32
    scf.if %15 {
      %c0_11 = arith.constant 0 : index
      %c0_12 = arith.constant 0 : index
      %16 = vector.load %arg7[%c0_11, %c0_12] : memref<1x128xf32, #tpu.memory_space<vmem>>, vector<1x128xf32>
      %cst_13 = arith.constant 3.906250e-03 : f32
      %17 = vector.broadcast %cst_13 : f32 to vector<1x128xf32>
      %18 = arith.mulf %16, %17 : vector<1x128xf32>
      %19 = tpu.iota {dimensions = array<i32: 1>} : vector<1x128xi32>
      %c127_i32 = arith.constant 127 : i32
      %20 = vector.broadcast %c127_i32 : i32 to vector<1x128xi32>
      %21 = arith.cmpi eq, %19, %20 : vector<1x128xi32>
      %cst_14 = arith.constant 1.000000e+00 : f32
      %22 = vector.broadcast %cst_14 : f32 to vector<1x128xf32>
      %23 = arith.select %21, %22, %18 : vector<1x128xi1>, vector<1x128xf32>
      %c0_15 = arith.constant 0 : index
      %c0_16 = arith.constant 0 : index
      %24 = vector.load %arg4[%c0_15, %c0_16] : memref<128x1024xf32, #tpu.memory_space<vmem>>, vector<128x1024xf32>
      %cst_17 = arith.constant dense<0.000000e+00> : vector<1x1024xf32>
      %25 = tpu.matmul %23, %24, %cst_17 {dimension_numbers = #tpu.dot_dimension_numbers<[1], [0], [0], [1], [0, 0, 1, 1], [], []>} : vector<1x128xf32>, vector<128x1024xf32>, vector<1x1024xf32> -> vector<1x1024xf32>
      %cst_18 = arith.constant 0.000000e+00 : f32
      %26 = vector.broadcast %cst_18 : f32 to vector<1x1024xf32>
      %27 = arith.maximumf %25, %26 : vector<1x1024xf32>
      %28 = tpu.iota {dimensions = array<i32: 1>} : vector<1x1024xi32>
      %c1023_i32 = arith.constant 1023 : i32
      %29 = vector.broadcast %c1023_i32 : i32 to vector<1x1024xi32>
      %30 = arith.cmpi eq, %28, %29 : vector<1x1024xi32>
      %cst_19 = arith.constant 1.000000e+00 : f32
      %31 = vector.broadcast %cst_19 : f32 to vector<1x1024xf32>
      %32 = arith.select %30, %31, %27 : vector<1x1024xi1>, vector<1x1024xf32>
      %c0_20 = arith.constant 0 : index
      %c0_21 = arith.constant 0 : index
      %33 = vector.load %arg5[%c0_20, %c0_21] : memref<1024x128xf32, #tpu.memory_space<vmem>>, vector<1024x128xf32>
      %cst_22 = arith.constant dense<0.000000e+00> : vector<1x128xf32>
      %34 = tpu.matmul %32, %33, %cst_22 {dimension_numbers = #tpu.dot_dimension_numbers<[1], [0], [0], [1], [0, 0, 1, 1], [], []>} : vector<1x1024xf32>, vector<1024x128xf32>, vector<1x128xf32> -> vector<1x128xf32>
      %c0_23 = arith.constant 0 : index
      %c0_24 = arith.constant 0 : index
      %c0_25 = arith.constant 0 : index
      %35 = vector.load %arg6[%c0_23, %c0_24, %c0_25] : memref<1x1x128xf32, #tpu.memory_space<vmem>>, vector<1x1x128xf32>
      %36 = vector.shape_cast %35 : vector<1x1x128xf32> to vector<1x128xf32>
      %37 = vector.shape_cast %34 : vector<1x128xf32> to vector<1x1x128xf32>
      tpu.vector_store %arg6[%c0_23, %c0_24, %c0_25], %37 {strides = array<i32>} : memref<1x1x128xf32, #tpu.memory_space<vmem>>, vector<1x1x128xf32>,
    } else {
    }
    return
  }
  func.func @transform_0(%arg0: i32, %arg1: i32) -> (i32, i32) {
    %c2_i32 = arith.constant 2 : i32
    %0 = arith.muli %arg0, %c2_i32 : i32
    %1 = arith.addi %0, %arg1 : i32
    %c0_i32 = arith.constant 0 : i32
    %c0_i32_0 = arith.constant 0 : i32
    return %1, %c0_i32 : i32, i32
  }
  func.func @transform_1(%arg0: i32, %arg1: i32) -> (i32, i32) {
    %c0_i32 = arith.constant 0 : i32
    %c0_i32_0 = arith.constant 0 : i32
    %c0_i32_1 = arith.constant 0 : i32
    return %c0_i32, %c0_i32_0 : i32, i32
  }
  func.func @transform_2(%arg0: i32, %arg1: i32) -> (i32, i32) {
    %c0_i32 = arith.constant 0 : i32
    %c0_i32_0 = arith.constant 0 : i32
    %c0_i32_1 = arith.constant 0 : i32
    return %c0_i32, %c0_i32_0 : i32, i32
  }
  func.func @transform_3(%arg0: i32, %arg1: i32) -> (i32, i32) {
    %c0_i32 = arith.constant 0 : i32
    %c0_i32_0 = arith.constant 0 : i32
    %c0_i32_1 = arith.constant 0 : i32
    return %c0_i32, %c0_i32_0 : i32, i32
  }
  func.func @transform_4(%arg0: i32, %arg1: i32) -> (i32, i32, i32) {
    %c0_i32 = arith.constant 0 : i32
    %c0_i32_0 = arith.constant 0 : i32
    %c0_i32_1 = arith.constant 0 : i32
    return %arg0, %c0_i32, %c0_i32_0 : i32, i32, i32
  }
}

</mosaic_0001>

<llo_original>
// kernel: cnn_forward.1
$region0: #{cnn_forward.1}
  #allocation0 [shape = 'u32[]', space=smem, size = 0x4, offset = 0x4, fixed_abs, tag = 'smem constant byte address 0x4 - core index']
  #allocation1 [shape = 'u32[72,128]{1,0:T(1,128)}', space=vmem, size = 0x9000, scoped, tag = 'internal scratch']
  #allocation2 [shape = 'f32[1,128]{1,0:T(1,128)}', space=vmem, size = 0x200, scoped, tag = 'scratch operand']
  %s0 = inlined_call_operand.vmem [shape: bf16[512,32], index: 0, kind: input, shape index: {}]
  %s1 = inlined_call_operand.vmem [shape: bf16[32,128], index: 1, kind: input, shape index: {}]
  %s2 = inlined_call_operand.vmem [shape: f32[128,1024], index: 2, kind: input, shape index: {}]
  %s3 = inlined_call_operand.vmem [shape: f32[1024,128], index: 3, kind: input, shape index: {}]
  %s4 = inlined_call_operand.hbm [shape: f32[2,1,128], index: 4, kind: output, shape index: {}]
  %s5 = sld [smem:[#allocation0]]
  $region57: #{cnn_forward.1} parent=0
    _
  %s7 = ssub.s32 1, %s5
  %s8 = scalar_select 0, %s7, %s5
  $region1: #{cnn_forward.1} parent=0
    #allocation3 [shape = 'u8[1024]{0}', space=vmem, size = 0x400, scoped, tag = 'output window, operand 0']
    #allocation4 [shape = 's32[2]{0}', space=sflag, size = 0x8, scoped, tag = 'scoped memory for cnn_forward.1']
    %9 = vsyncpa [#allocation4], 0
    %s10 = scalar_lea.sflag [#allocation4], 1
    %11 = vsyncpa %s10, 0
    loop: start=0, step=1, limit=6
    $region2: #{cnn_forward.1} parent=1 // loop_pre_header
      _
    $region3: #{cnn_forward.1} parent=1 // loop_header
      %s13 = sphi 0, %s17
      %p14 = scmp.ge.s32.totalorder %s13, 6
      %s20 = sphi 0, %s32
      %s21 = sphi 0, %s28
      %s22 = sphi 0, %s20
      %s23 = sphi 0, %s21
      %s24 = sphi 0, %s22
      %s25 = sphi 0, %s23
      %s39 = sphi 0, %s41
      %s42 = sphi 0, %s39
      %s43 = sphi 0, %s42
      %s59 = sphi 0, %s43
      %s63 = sphi 0, %s63
      %s65 = sphi 0, %s63
      %s66 = sphi 0, %s65
      %s80 = sphi 0, %s66
      %s84 = sphi 0, %s84
      %s86 = sphi 0, %s84
      %s87 = sphi 0, %s86
      %s101 = sphi 0, %s87
      %s105 = sphi 0, %s105
      %s107 = sphi 0, %s105
      %s108 = sphi 0, %s107
      %s122 = sphi 0, %s108
      %s128 = sphi 0, %s130
      %s131 = sphi 0, %s128
      %s132 = sphi 0, %s131
      %s148 = sphi 0, %s132
    $region4: #{cnn_forward.1} parent=1 // loop_header_branch
      %16 = sbr.rel (%p14) target = $region8
    $region5: #{cnn_forward.1} parent=1 // loop_body
      %s18 = ssub.s32 %s13, 1
      %s19 = ssub.s32 %s13, 2
      %s26 = sadd.s32 1, %s21
      %p27 = scmp.ge.s32.totalorder %s26, 2
      %s28 = scalar_select %p27, 0, %s26
      %s29 = sadd.s32 1, %s20
      %s30 = scalar_select %p27, %s29, %s20
      %p31 = scmp.ge.s32.totalorder %s30, 2
      %s32 = scalar_select %p31, 0, %s30
      %s33 = smul.u32 %s20, 2
      %s34 = sadd.s32 %s33, %s21
      %s35 = smul.u32 %s32, 2
      %s36 = sadd.s32 %s35, %s28
      %s37 = ssub.s32 %s34, %s36
      %p38 = scmp.eq.s32.totalorder %s37, 0
      %s40 = sadd.s32 %s39, 1
      %s41 = scalar_select %p38, %s39, %s40
      %p44 = pneg %p38
      %p45 = scmp.eq.s32.totalorder %s13, 3
      %p46 = por %p44, %p45
      %p47 = scmp.ne.s32.totalorder %s39, %s42
      %p48 = scmp.eq.s32.totalorder %s13, 0
      %p49 = por %p47, %p48
      %p50 = scmp.ne.s32.totalorder %s39, %s42
      %p51 = scmp.eq.s32.totalorder %s18, 3
      %p52 = por %p50, %p51
      %p53 = scmp.ne.s32.totalorder %s42, %s43
      %p54 = scmp.eq.s32.totalorder %s18, 0
      %p55 = por %p53, %p54
      %p56 = scmp.ne.s32.totalorder %s42, %s43
      %p57 = scmp.eq.s32.totalorder %s19, 3
      %p58 = por %p56, %p57
      %p60 = scmp.ne.s32.totalorder %s43, %s59
      %p61 = scmp.eq.s32.totalorder %s19, 0
      %p62 = por %p60, %p61
      %s64 = sadd.s32 %s63, 1
      %p67 = scmp.eq.s32.totalorder %s13, 3
      %p68 = scmp.ne.s32.totalorder %s63, %s65
      %p69 = scmp.eq.s32.totalorder %s13, 0
      %p70 = por %p68, %p69
      %p71 = scmp.ne.s32.totalorder %s63, %s65
      %p72 = scmp.eq.s32.totalorder %s18, 3
      %p73 = por %p71, %p72
      %p74 = scmp.ne.s32.totalorder %s65, %s66
      %p75 = scmp.eq.s32.totalorder %s18, 0
      %p76 = por %p74, %p75
      %p77 = scmp.ne.s32.totalorder %s65, %s66
      %p78 = scmp.eq.s32.totalorder %s19, 3
      %p79 = por %p77, %p78
      %p81 = scmp.ne.s32.totalorder %s66, %s80
      %p82 = scmp.eq.s32.totalorder %s19, 0
      %p83 = por %p81, %p82
      %s85 = sadd.s32 %s84, 1
      %p88 = scmp.eq.s32.totalorder %s13, 3
      %p89 = scmp.ne.s32.totalorder %s84, %s86
      %p90 = scmp.eq.s32.totalorder %s13, 0
      %p91 = por %p89, %p90
      %p92 = scmp.ne.s32.totalorder %s84, %s86
      %p93 = scmp.eq.s32.totalorder %s18, 3
      %p94 = por %p92, %p93
      %p95 = scmp.ne.s32.totalorder %s86, %s87
      %p96 = scmp.eq.s32.totalorder %s18, 0
      %p97 = por %p95, %p96
      %p98 = scmp.ne.s32.totalorder %s86, %s87
      %p99 = scmp.eq.s32.totalorder %s19, 3
      %p100 = por %p98, %p99
      %p102 = scmp.ne.s32.totalorder %s87, %s101
      %p103 = scmp.eq.s32.totalorder %s19, 0
      %p104 = por %p102, %p103
      %s106 = sadd.s32 %s105, 1
      %p109 = scmp.eq.s32.totalorder %s13, 3
      %p110 = scmp.ne.s32.totalorder %s105, %s107
      %p111 = scmp.eq.s32.totalorder %s13, 0
      %p112 = por %p110, %p111
      %p113 = scmp.ne.s32.totalorder %s105, %s107
      %p114 = scmp.eq.s32.totalorder %s18, 3
      %p115 = por %p113, %p114
      %p116 = scmp.ne.s32.totalorder %s107, %s108
      %p117 = scmp.eq.s32.totalorder %s18, 0
      %p118 = por %p116, %p117
      %p119 = scmp.ne.s32.totalorder %s107, %s108
      %p120 = scmp.eq.s32.totalorder %s19, 3
      %p121 = por %p119, %p120
      %p123 = scmp.ne.s32.totalorder %s108, %s122
      %p124 = scmp.eq.s32.totalorder %s19, 0
      %p125 = por %p123, %p124
      %s126 = ssub.s32 %s20, %s32
      %p127 = scmp.eq.s32.totalorder %s126, 0
      %s129 = sadd.s32 %s128, 1
      %s130 = scalar_select %p127, %s128, %s129
      %p133 = pneg %p127
      %p134 = scmp.eq.s32.totalorder %s13, 3
      %p135 = por %p133, %p134
      %p136 = scmp.ne.s32.totalorder %s128, %s131
      %p137 = scmp.eq.s32.totalorder %s13, 0
      %p138 = por %p136, %p137
      %p139 = scmp.ne.s32.totalorder %s128, %s131
      %p140 = scmp.eq.s32.totalorder %s18, 3
      %p141 = por %p139, %p140
      %p142 = scmp.ne.s32.totalorder %s131, %s132
      %p143 = scmp.eq.s32.totalorder %s18, 0
      %p144 = por %p142, %p143
      %p145 = scmp.ne.s32.totalorder %s131, %s132
      %p146 = scmp.eq.s32.totalorder %s19, 3
      %p147 = por %p145, %p146
      %p149 = scmp.ne.s32.totalorder %s132, %s148
      %p150 = scmp.eq.s32.totalorder %s19, 0
      %p151 = por %p149, %p150
      %p152 = scmp.le.s32.totalorder 1, %s13
      %p153 = scmp.lt.s32.totalorder %s13, 5
      %p154 = pnand %p152, %p153
      %p155 = pneg %p154
      // Predicated region
      $region9: #{cnn_forward.1} parent=5 // pred_check
        _
      $region10: #{cnn_forward.1} parent=5 // pred_check_branch
        %157 = sbr.rel (%p154) target = $region12
      $region11: #{cnn_forward.1} parent=5 // pred_region
        %s158 = ssub.s32 %s13, 1
        // Predicated region
        $region13: #{cnn_forward.1} parent=11 // pred_check
          %p159 = pneg %p76
        $region14: #{cnn_forward.1} parent=11 // pred_check_branch
          %161 = sbr.rel (%p159) target = $region16
        $region15: #{cnn_forward.1} parent=11 // pred_region
          _
        $region16: #{cnn_forward.1} parent=11 // pred_fallthru
          _
        // Predicated region
        $region17: #{cnn_forward.1} parent=11 // pred_check
          %p162 = pneg %p97
        $region18: #{cnn_forward.1} parent=11 // pred_check_branch
          %164 = sbr.rel (%p162) target = $region20
        $region19: #{cnn_forward.1} parent=11 // pred_region
          _
        $region20: #{cnn_forward.1} parent=11 // pred_fallthru
          _
        // Predicated region
        $region21: #{cnn_forward.1} parent=11 // pred_check
          %p165 = pneg %p118
        $region22: #{cnn_forward.1} parent=11 // pred_check_branch
          %167 = sbr.rel (%p165) target = $region24
        $region23: #{cnn_forward.1} parent=11 // pred_region
          _
        $region24: #{cnn_forward.1} parent=11 // pred_fallthru
          _
      $region12: #{cnn_forward.1} parent=5 // pred_fallthru
        _
      %p168 = scmp.lt.s32.totalorder %s13, 4
      // Predicated region
      $region25: #{cnn_forward.1} parent=5 // pred_check
        %p169 = pneg %p168
      $region26: #{cnn_forward.1} parent=5 // pred_check_branch
        %171 = sbr.rel (%p169) target = $region28
      $region27: #{cnn_forward.1} parent=5 // pred_region
        // Predicated region
        $region29: #{cnn_forward.1} parent=27 // pred_check
          %p172 = pneg %p49
        $region30: #{cnn_forward.1} parent=27 // pred_check_branch
          %174 = sbr.rel (%p172) target = $region32
        $region31: #{cnn_forward.1} parent=27 // pred_region
          %s175 = smul.u32 %s20, 2
          %s176 = sadd.s32 %s175, %s21
          %s177 = smul.u32 16, %s176
          %p178 = scmp.lt.s32.totalorder %s177, 63
          %s179 = scalar_select %p178, %s177, 63
          %s180 = smul.addr %s179, 4
          %s181 = scalar_lea.vmem %s0, %s180
          %s182 = smul.u32 %s20, 2
          %s183 = sadd.s32 %s182, %s21
          %s184 = smul.u32 16, %s183
        $region32: #{cnn_forward.1} parent=27 // pred_fallthru
          _
      $region28: #{cnn_forward.1} parent=5 // pred_fallthru
        _
      %p185 = scmp.le.s32.totalorder 1, %s13
      %p186 = scmp.lt.s32.totalorder %s13, 5
      %p187 = pnand %p185, %p186
      %p188 = pneg %p187
      // Predicated region
      $region33: #{cnn_forward.1} parent=5 // pred_check
        _
      $region34: #{cnn_forward.1} parent=5 // pred_check_branch
        %190 = sbr.rel (%p187) target = $region36
      $region35: #{cnn_forward.1} parent=5 // pred_region
        %s191 = ssub.s32 %s13, 1
        %s192 = smul.u32 %s22, 2
        %s193 = sadd.s32 %s192, %s23
        %s194 = smul.u32 16, %s193
        %p195 = scmp.lt.s32.totalorder %s194, 63
        %s196 = scalar_select %p195, %s194, 63
        %s197 = smul.addr %s196, 4
        %s198 = scalar_lea.vmem %s0, %s197
        %p199 = pneg %p55
        %p200 = pneg %p52
        %p201 = pneg %p76
        %p202 = pneg %p73
        %p203 = pneg %p97
        %p204 = pneg %p94
        %p205 = pneg %p118
        %p206 = pneg %p115
        %p207 = pneg %p144
        %p208 = pneg %p141
        %s209 = sand.u32 %s131, 1
        %s210 = scalar_lea.sflag [#allocation4], %s209
        %s211 = sand.u32 %s131, 1
        %s212 = scalar_lea.vmem [#allocation3], %s211
        %s213 = smul.u32 %s22, 2
        %s214 = sadd.s32 %s213, %s23
        %s215 = smul.u32 16, %s214
        %p216 = scmp.lt.s32.totalorder %s215, 63
        %s217 = scalar_select %p216, %s215, 63
        %s218 = smul.addr %s217, 4
        %s219 = scalar_lea.vmem %s0, %s218
        %s220 = smul.u32 %s22, 2
        %s221 = sadd.s32 %s220, %s23
        %s222 = smul.u32 16, %s221
        %p224 = scmp.eq.s32.totalorder %s23, 0
        // Predicated region
        $region37: #{cnn_forward.1} parent=35 // pred_check
          %p225 = pneg %p224
        $region38: #{cnn_forward.1} parent=35 // pred_check_branch
          %227 = sbr.rel (%p225) target = $region40
        $region39: #{cnn_forward.1} parent=35 // pred_region
          %228 = vst [vmem:[#allocation2] sm:$0x1] 0.0
        $region40: #{cnn_forward.1} parent=35 // pred_fallthru
          _
        %v229 = vld [vmem:[%s219] sm:$0xf]
        %v230 = vld [vmem:[%s219 + $0x4] sm:$0xf]
        %v231 = vld [vmem:[%s219 + $0x8] sm:$0xf]
        %v232 = vld [vmem:[%s219 + $0xc] sm:$0xf]
        %v233 = vld [vmem:[%s219 + $0x10] sm:$0xf]
        %v234 = vld [vmem:[%s219 + $0x14] sm:$0xf]
        %v235 = vld [vmem:[%s219 + $0x18] sm:$0xf]
        %v236 = vld [vmem:[%s219 + $0x1c] sm:$0xf]
        %v237 = vld [vmem:[%s219 + $0x20] sm:$0xf]
        %v238 = vld [vmem:[%s219 + $0x24] sm:$0xf]
        %v239 = vld [vmem:[%s219 + $0x28] sm:$0xf]
        %v240 = vld [vmem:[%s219 + $0x2c] sm:$0xf]
        %v241 = vld [vmem:[%s219 + $0x30] sm:$0xf]
        %v242 = vld [vmem:[%s219 + $0x34] sm:$0xf]
        %v243 = vld [vmem:[%s219 + $0x38] sm:$0xf]
        %v244 = vld [vmem:[%s219 + $0x3c] sm:$0xf]
        %v245 = vld [vmem:[%s1] sm:$0xf]
        %v246 = vld [vmem:[%s1 + $0x4] sm:$0xf]
        %v247 = vld [vmem:[%s1 + $0x8] sm:$0xf]
        %v248 = vld [vmem:[%s1 + $0xc] sm:$0xf]
        %v265 = vunpack.c.l.b16 %v229
        %v266 = vunpack.c.l.b16 %v230
        %v267 = vunpack.c.l.b16 %v231
        %v268 = vunpack.c.l.b16 %v232
        %v269 = vunpack.c.l.b16 %v233
        %v270 = vunpack.c.l.b16 %v234
        %v271 = vunpack.c.l.b16 %v235
        %v272 = vunpack.c.l.b16 %v236
        %v273 = vunpack.c.l.b16 %v237
        %v274 = vunpack.c.l.b16 %v238
        %v275 = vunpack.c.l.b16 %v239
        %v276 = vunpack.c.l.b16 %v240
        %v277 = vunpack.c.l.b16 %v241
        %v278 = vunpack.c.l.b16 %v242
        %v279 = vunpack.c.l.b16 %v243
        %v280 = vunpack.c.l.b16 %v244
        %v281 = vpack.c.b16 %v266, %v265
        %v282 = vpack.c.b16 %v268, %v267
        %v283 = vpack.c.b16 %v270, %v269
        %v284 = vpack.c.b16 %v272, %v271
        %v285 = vpack.c.b16 %v274, %v273
        %v286 = vpack.c.b16 %v276, %v275
        %v287 = vpack.c.b16 %v278, %v277
        %v288 = vpack.c.b16 %v280, %v279
        %v293 = vunpack.c.l.b16 %v245
        %v294 = vunpack.c.l.b16 %v246
        %v295 = vunpack.c.l.b16 %v247
        %v296 = vunpack.c.l.b16 %v248
        %v297 = vpack.c.b16 %v294, %v293
        %v298 = vpack.c.b16 %v296, %v295
        %vm301 = vcmask 261120
        %v303 = vsel %vm301, %v281, 0
        %v306 = vsel %vm301, %v282, 0
        %v309 = vsel %vm301, %v283, 0
        %v312 = vsel %vm301, %v284, 0
        %v315 = vsel %vm301, %v285, 0
        %v318 = vsel %vm301, %v286, 0
        %v321 = vsel %vm301, %v287, 0
        %v324 = vsel %vm301, %v288, 0
        %326 = vmatpush.bf16.msra.mxu0 0
        %327 = vmatpush.bf16.msra.mxu0 0
        %328 = vmatpush.bf16.msra.mxu0 0
        %329 = vmatpush.bf16.msra.mxu0 0
        %330 = vmatpush.bf16.msra.mxu0 0
        %331 = vmatpush.bf16.msra.mxu0 0
        %332 = vmatpush.bf16.msra.mxu0 %v298
        %333 = vmatpush.bf16.msra.mxu0 %v297
        %334 = vmatmul.bf16.gmra.mxu0 %v303
        %v335 = vpop.f32.mrf.mxu0
        %v336 = vadd.f32 0.0, %v335
        %v337 = vpop.f32.mrf.mxu0
        %v338 = vadd.f32 0.0, %v337
        %339 = vmatmul.bf16.gmra.mxu0 %v306
        %v340 = vpop.f32.mrf.mxu0
        %v341 = vadd.f32 0.0, %v340
        %v342 = vpop.f32.mrf.mxu0
        %v343 = vadd.f32 0.0, %v342
        %344 = vmatmul.bf16.gmra.mxu0 %v309
        %v345 = vpop.f32.mrf.mxu0
        %v346 = vadd.f32 0.0, %v345
        %v347 = vpop.f32.mrf.mxu0
        %v348 = vadd.f32 0.0, %v347
        %349 = vmatmul.bf16.gmra.mxu0 %v312
        %v350 = vpop.f32.mrf.mxu0
        %v351 = vadd.f32 0.0, %v350
        %v352 = vpop.f32.mrf.mxu0
        %v353 = vadd.f32 0.0, %v352
        %354 = vmatmul.bf16.gmra.mxu0 %v315
        %v355 = vpop.f32.mrf.mxu0
        %v356 = vadd.f32 0.0, %v355
        %v357 = vpop.f32.mrf.mxu0
        %v358 = vadd.f32 0.0, %v357
        %359 = vmatmul.bf16.gmra.mxu0 %v318
        %v360 = vpop.f32.mrf.mxu0
        %v361 = vadd.f32 0.0, %v360
        %v362 = vpop.f32.mrf.mxu0
        %v363 = vadd.f32 0.0, %v362
        %364 = vmatmul.bf16.gmra.mxu0 %v321
        %v365 = vpop.f32.mrf.mxu0
        %v366 = vadd.f32 0.0, %v365
        %v367 = vpop.f32.mrf.mxu0
        %v368 = vadd.f32 0.0, %v367
        %369 = vmatmul.bf16.gmra.mxu0 %v324
        %v370 = vpop.f32.mrf.mxu0
        %v371 = vadd.f32 0.0, %v370
        %v372 = vpop.f32.mrf.mxu0
        %v373 = vadd.f32 0.0, %v372
        %374 = vdwg.mxu0
        %v375 = vmax.f32 %v336, 0.0
        %v376 = vmax.f32 %v338, 0.0
        %v377 = vmax.f32 %v341, 0.0
        %v378 = vmax.f32 %v343, 0.0
        %v379 = vmax.f32 %v346, 0.0
        %v380 = vmax.f32 %v348, 0.0
        %v381 = vmax.f32 %v351, 0.0
        %v382 = vmax.f32 %v353, 0.0
        %v383 = vmax.f32 %v356, 0.0
        %v384 = vmax.f32 %v358, 0.0
        %v385 = vmax.f32 %v361, 0.0
        %v386 = vmax.f32 %v363, 0.0
        %v387 = vmax.f32 %v366, 0.0
        %v388 = vmax.f32 %v368, 0.0
        %v389 = vmax.f32 %v371, 0.0
        %v390 = vmax.f32 %v373, 0.0
        %v391 = vld [vmem:[#allocation2] sm:$0x1]
        %v392 = vadd.f32 %v375, %v376
        %v393 = vadd.f32 %v392, %v377
        %v394 = vadd.f32 %v393, %v378
        %v395 = vadd.f32 %v394, %v379
        %v396 = vadd.f32 %v395, %v380
        %v397 = vadd.f32 %v396, %v381
        %v398 = vadd.f32 %v397, %v382
        %v399 = vadd.f32 %v398, %v383
        %v400 = vadd.f32 %v399, %v384
        %v401 = vadd.f32 %v400, %v385
        %v402 = vadd.f32 %v401, %v386
        %v403 = vadd.f32 %v402, %v387
        %v404 = vadd.f32 %v403, %v388
        %v405 = vadd.f32 %v404, %v389
        %v406 = vadd.f32 %v405, %v390
        %v407 = vrot.slane %v406, 4
        %v408 = vadd.f32 %v406, %v407
        %v409 = vrot.slane %v408, 2
        %v410 = vadd.f32 %v408, %v409
        %v411 = vrot.slane %v410, 1
        %v412 = vadd.f32 %v410, %v411
        %v413 = vadd.f32 %v391, %v412
        %414 = vst [vmem:[#allocation2] sm:$0x1] %v413
        %p415 = scmp.eq.s32.totalorder %s23, 1
        // Predicated region
        $region41: #{cnn_forward.1} parent=35 // pred_check
          %p416 = pneg %p415
        $region42: #{cnn_forward.1} parent=35 // pred_check_branch
          %418 = sbr.rel (%p416) target = $region44
        $region43: #{cnn_forward.1} parent=35 // pred_region
          %v419 = vld [vmem:[#allocation2] sm:$0x1]
          %v420 = vmul.f32 %v419, 0.00390625
          %v421 = vlaneseq
          %v422 = vand.u32 %v421, 127
          %vm423 = vcmp.eq.s32.totalorder %v422, 127
          %v424 = vsel %vm423, 1.0, %v420
          %v425 = vld [vmem:[%s2] sm:$0xff]
          %v426 = vld [vmem:[%s2 + $0x8] sm:$0xff]
          %v427 = vld [vmem:[%s2 + $0x10] sm:$0xff]
          %v428 = vld [vmem:[%s2 + $0x18] sm:$0xff]
          %v429 = vld [vmem:[%s2 + $0x20] sm:$0xff]
          %v430 = vld [vmem:[%s2 + $0x28] sm:$0xff]
          %v431 = vld [vmem:[%s2 + $0x30] sm:$0xff]
          %v432 = vld [vmem:[%s2 + $0x38] sm:$0xff]
          %v433 = vld [vmem:[%s2 + $0x40] sm:$0xff]
          %v434 = vld [vmem:[%s2 + $0x48] sm:$0xff]
          %v435 = vld [vmem:[%s2 + $0x50] sm:$0xff]
          %v436 = vld [vmem:[%s2 + $0x58] sm:$0xff]
          %v437 = vld [vmem:[%s2 + $0x60] sm:$0xff]
          %v438 = vld [vmem:[%s2 + $0x68] sm:$0xff]
          %v439 = vld [vmem:[%s2 + $0x70] sm:$0xff]
          %v440 = vld [vmem:[%s2 + $0x78] sm:$0xff]
          %v441 = vld [vmem:[%s2 + $0x80] sm:$0xff]
          %v442 = vld [vmem:[%s2 + $0x88] sm:$0xff]
          %v443 = vld [vmem:[%s2 + $0x90] sm:$0xff]
          %v444 = vld [vmem:[%s2 + $0x98] sm:$0xff]
          %v445 = vld [vmem:[%s2 + $0xa0] sm:$0xff]
          %v446 = vld [vmem:[%s2 + $0xa8] sm:$0xff]
          %v447 = vld [vmem:[%s2 + $0xb0] sm:$0xff]
          %v448 = vld [vmem:[%s2 + $0xb8] sm:$0xff]
          %v449 = vld [vmem:[%s2 + $0xc0] sm:$0xff]
          %v450 = vld [vmem:[%s2 + $0xc8] sm:$0xff]
          %v451 = vld [vmem:[%s2 + $0xd0] sm:$0xff]
          %v452 = vld [vmem:[%s2 + $0xd8] sm:$0xff]
          %v453 = vld [vmem:[%s2 + $0xe0] sm:$0xff]
          %v454 = vld [vmem:[%s2 + $0xe8] sm:$0xff]
          %v455 = vld [vmem:[%s2 + $0xf0] sm:$0xff]
          %v456 = vld [vmem:[%s2 + $0xf8] sm:$0xff]
          %v457 = vld [vmem:[%s2 + $0x100] sm:$0xff]
          %v458 = vld [vmem:[%s2 + $0x108] sm:$0xff]
          %v459 = vld [vmem:[%s2 + $0x110] sm:$0xff]
          %v460 = vld [vmem:[%s2 + $0x118] sm:$0xff]
          %v461 = vld [vmem:[%s2 + $0x120] sm:$0xff]
          %v462 = vld [vmem:[%s2 + $0x128] sm:$0xff]
          %v463 = vld [vmem:[%s2 + $0x130] sm:$0xff]
          %v464 = vld [vmem:[%s2 + $0x138] sm:$0xff]
          %v465 = vld [vmem:[%s2 + $0x140] sm:$0xff]
          %v466 = vld [vmem:[%s2 + $0x148] sm:$0xff]
          %v467 = vld [vmem:[%s2 + $0x150] sm:$0xff]
          %v468 = vld [vmem:[%s2 + $0x158] sm:$0xff]
          %v469 = vld [vmem:[%s2 + $0x160] sm:$0xff]
          %v470 = vld [vmem:[%s2 + $0x168] sm:$0xff]
          %v471 = vld [vmem:[%s2 + $0x170] sm:$0xff]
          %v472 = vld [vmem:[%s2 + $0x178] sm:$0xff]
          %v473 = vld [vmem:[%s2 + $0x180] sm:$0xff]
          %v474 = vld [vmem:[%s2 + $0x188] sm:$0xff]
          %v475 = vld [vmem:[%s2 + $0x190] sm:$0xff]
          %v476 = vld [vmem:[%s2 + $0x198] sm:$0xff]
          %v477 = vld [vmem:[%s2 + $0x1a0] sm:$0xff]
          %v478 = vld [vmem:[%s2 + $0x1a8] sm:$0xff]
          %v479 = vld [vmem:[%s2 + $0x1b0] sm:$0xff]
          %v480 = vld [vmem:[%s2 + $0x1b8] sm:$0xff]
          %v481 = vld [vmem:[%s2 + $0x1c0] sm:$0xff]
          %v482 = vld [vmem:[%s2 + $0x1c8] sm:$0xff]
          %v483 = vld [vmem:[%s2 + $0x1d0] sm:$0xff]
          %v484 = vld [vmem:[%s2 + $0x1d8] sm:$0xff]
          %v485 = vld [vmem:[%s2 + $0x1e0] sm:$0xff]
          %v486 = vld [vmem:[%s2 + $0x1e8] sm:$0xff]
          %v487 = vld [vmem:[%s2 + $0x1f0] sm:$0xff]
          %v488 = vld [vmem:[%s2 + $0x1f8] sm:$0xff]
          %v489 = vld [vmem:[%s2 + $0x200] sm:$0xff]
          %v490 = vld [vmem:[%s2 + $0x208] sm:$0xff]
          %v491 = vld [vmem:[%s2 + $0x210] sm:$0xff]
          %v492 = vld [vmem:[%s2 + $0x218] sm:$0xff]
          %v493 = vld [vmem:[%s2 + $0x220] sm:$0xff]
          %v494 = vld [vmem:[%s2 + $0x228] sm:$0xff]
          %v495 = vld [vmem:[%s2 + $0x230] sm:$0xff]
          %v496 = vld [vmem:[%s2 + $0x238] sm:$0xff]
          %v497 = vld [vmem:[%s2 + $0x240] sm:$0xff]
          %v498 = vld [vmem:[%s2 + $0x248] sm:$0xff]
          %v499 = vld [vmem:[%s2 + $0x250] sm:$0xff]
          %v500 = vld [vmem:[%s2 + $0x258] sm:$0xff]
          %v501 = vld [vmem:[%s2 + $0x260] sm:$0xff]
          %v502 = vld [vmem:[%s2 + $0x268] sm:$0xff]
          %v503 = vld [vmem:[%s2 + $0x270] sm:$0xff]
          %v504 = vld [vmem:[%s2 + $0x278] sm:$0xff]
          %v505 = vld [vmem:[%s2 + $0x280] sm:$0xff]
          %v506 = vld [vmem:[%s2 + $0x288] sm:$0xff]
          %v507 = vld [vmem:[%s2 + $0x290] sm:$0xff]
          %v508 = vld [vmem:[%s2 + $0x298] sm:$0xff]
          %v509 = vld [vmem:[%s2 + $0x2a0] sm:$0xff]
          %v510 = vld [vmem:[%s2 + $0x2a8] sm:$0xff]
          %v511 = vld [vmem:[%s2 + $0x2b0] sm:$0xff]
          %v512 = vld [vmem:[%s2 + $0x2b8] sm:$0xff]
          %v513 = vld [vmem:[%s2 + $0x2c0] sm:$0xff]
          %v514 = vld [vmem:[%s2 + $0x2c8] sm:$0xff]
          %v515 = vld [vmem:[%s2 + $0x2d0] sm:$0xff]
          %v516 = vld [vmem:[%s2 + $0x2d8] sm:$0xff]
          %v517 = vld [vmem:[%s2 + $0x2e0] sm:$0xff]
          %v518 = vld [vmem:[%s2 + $0x2e8] sm:$0xff]
          %v519 = vld [vmem:[%s2 + $0x2f0] sm:$0xff]
          %v520 = vld [vmem:[%s2 + $0x2f8] sm:$0xff]
          %v521 = vld [vmem:[%s2 + $0x300] sm:$0xff]
          %v522 = vld [vmem:[%s2 + $0x308] sm:$0xff]
          %v523 = vld [vmem:[%s2 + $0x310] sm:$0xff]
          %v524 = vld [vmem:[%s2 + $0x318] sm:$0xff]
          %v525 = vld [vmem:[%s2 + $0x320] sm:$0xff]
          %v526 = vld [vmem:[%s2 + $0x328] sm:$0xff]
          %v527 = vld [vmem:[%s2 + $0x330] sm:$0xff]
          %v528 = vld [vmem:[%s2 + $0x338] sm:$0xff]
          %v529 = vld [vmem:[%s2 + $0x340] sm:$0xff]
          %v530 = vld [vmem:[%s2 + $0x348] sm:$0xff]
          %v531 = vld [vmem:[%s2 + $0x350] sm:$0xff]
          %v532 = vld [vmem:[%s2 + $0x358] sm:$0xff]
          %v533 = vld [vmem:[%s2 + $0x360] sm:$0xff]
          %v534 = vld [vmem:[%s2 + $0x368] sm:$0xff]
          %v535 = vld [vmem:[%s2 + $0x370] sm:$0xff]
          %v536 = vld [vmem:[%s2 + $0x378] sm:$0xff]
          %v537 = vld [vmem:[%s2 + $0x380] sm:$0xff]
          %v538 = vld [vmem:[%s2 + $0x388] sm:$0xff]
          %v539 = vld [vmem:[%s2 + $0x390] sm:$0xff]
          %v540 = vld [vmem:[%s2 + $0x398] sm:$0xff]
          %v541 = vld [vmem:[%s2 + $0x3a0] sm:$0xff]
          %v542 = vld [vmem:[%s2 + $0x3a8] sm:$0xff]
          %v543 = vld [vmem:[%s2 + $0x3b0] sm:$0xff]
          %v544 = vld [vmem:[%s2 + $0x3b8] sm:$0xff]
          %v545 = vld [vmem:[%s2 + $0x3c0] sm:$0xff]
          %v546 = vld [vmem:[%s2 + $0x3c8] sm:$0xff]
          %v547 = vld [vmem:[%s2 + $0x3d0] sm:$0xff]
          %v548 = vld [vmem:[%s2 + $0x3d8] sm:$0xff]
          %v549 = vld [vmem:[%s2 + $0x3e0] sm:$0xff]
          %v550 = vld [vmem:[%s2 + $0x3e8] sm:$0xff]
          %v551 = vld [vmem:[%s2 + $0x3f0] sm:$0xff]
          %v552 = vld [vmem:[%s2 + $0x3f8] sm:$0xff]
          %553 = vmatpush.msra.mxu0 %v545
          %554 = vmatpush.msra.mxu0 %v537
          %555 = vmatpush.msra.mxu0 %v529
          %556 = vmatpush.msra.mxu0 %v521
          %557 = vmatpush.msra.mxu0 %v513
          %558 = vmatpush.msra.mxu0 %v505
          %559 = vmatpush.msra.mxu0 %v497
          %560 = vmatpush.msra.mxu0 %v489
          %561 = vmatpush.msra.mxu0 %v481
          %562 = vmatpush.msra.mxu0 %v473
          %563 = vmatpush.msra.mxu0 %v465
          %564 = vmatpush.msra.mxu0 %v457
          %565 = vmatpush.msra.mxu0 %v449
          %566 = vmatpush.msra.mxu0 %v441
          %567 = vmatpush.msra.mxu0 %v433
          %568 = vmatpush.msra.mxu0 %v425
          %569 = vmatmul.f32.gmra.mxu0 %v424
          %v570 = vpop.f32.mrf.mxu0
          %v571 = vadd.f32 0.0, %v570
          %572 = vdwg.mxu0
          %573 = vmatpush.msra.mxu0 %v546
          %574 = vmatpush.msra.mxu0 %v538
          %575 = vmatpush.msra.mxu0 %v530
          %576 = vmatpush.msra.mxu0 %v522
          %577 = vmatpush.msra.mxu0 %v514
          %578 = vmatpush.msra.mxu0 %v506
          %579 = vmatpush.msra.mxu0 %v498
          %580 = vmatpush.msra.mxu0 %v490
          %581 = vmatpush.msra.mxu0 %v482
          %582 = vmatpush.msra.mxu0 %v474
          %583 = vmatpush.msra.mxu0 %v466
          %584 = vmatpush.msra.mxu0 %v458
          %585 = vmatpush.msra.mxu0 %v450
          %586 = vmatpush.msra.mxu0 %v442
          %587 = vmatpush.msra.mxu0 %v434
          %588 = vmatpush.msra.mxu0 %v426
          %589 = vmatmul.f32.gmra.mxu0 %v424
          %v590 = vpop.f32.mrf.mxu0
          %v591 = vadd.f32 0.0, %v590
          %592 = vdwg.mxu0
          %593 = vmatpush.msra.mxu0 %v547
          %594 = vmatpush.msra.mxu0 %v539
          %595 = vmatpush.msra.mxu0 %v531
          %596 = vmatpush.msra.mxu0 %v523
          %597 = vmatpush.msra.mxu0 %v515
          %598 = vmatpush.msra.mxu0 %v507
          %599 = vmatpush.msra.mxu0 %v499
          %600 = vmatpush.msra.mxu0 %v491
          %601 = vmatpush.msra.mxu0 %v483
          %602 = vmatpush.msra.mxu0 %v475
          %603 = vmatpush.msra.mxu0 %v467
          %604 = vmatpush.msra.mxu0 %v459
          %605 = vmatpush.msra.mxu0 %v451
          %606 = vmatpush.msra.mxu0 %v443
          %607 = vmatpush.msra.mxu0 %v435
          %608 = vmatpush.msra.mxu0 %v427
          %609 = vmatmul.f32.gmra.mxu0 %v424
          %v610 = vpop.f32.mrf.mxu0
          %v611 = vadd.f32 0.0, %v610
          %612 = vdwg.mxu0
          %613 = vmatpush.msra.mxu0 %v548
          %614 = vmatpush.msra.mxu0 %v540
          %615 = vmatpush.msra.mxu0 %v532
          %616 = vmatpush.msra.mxu0 %v524
          %617 = vmatpush.msra.mxu0 %v516
          %618 = vmatpush.msra.mxu0 %v508
          %619 = vmatpush.msra.mxu0 %v500
          %620 = vmatpush.msra.mxu0 %v492
          %621 = vmatpush.msra.mxu0 %v484
          %622 = vmatpush.msra.mxu0 %v476
          %623 = vmatpush.msra.mxu0 %v468
          %624 = vmatpush.msra.mxu0 %v460
          %625 = vmatpush.msra.mxu0 %v452
          %626 = vmatpush.msra.mxu0 %v444
          %627 = vmatpush.msra.mxu0 %v436
          %628 = vmatpush.msra.mxu0 %v428
          %629 = vmatmul.f32.gmra.mxu0 %v424
          %v630 = vpop.f32.mrf.mxu0
          %v631 = vadd.f32 0.0, %v630
          %632 = vdwg.mxu0
          %633 = vmatpush.msra.mxu0 %v549
          %634 = vmatpush.msra.mxu0 %v541
          %635 = vmatpush.msra.mxu0 %v533
          %636 = vmatpush.msra.mxu0 %v525
          %637 = vmatpush.msra.mxu0 %v517
          %638 = vmatpush.msra.mxu0 %v509
          %639 = vmatpush.msra.mxu0 %v501
          %640 = vmatpush.msra.mxu0 %v493
          %641 = vmatpush.msra.mxu0 %v485
          %642 = vmatpush.msra.mxu0 %v477
          %643 = vmatpush.msra.mxu0 %v469
          %644 = vmatpush.msra.mxu0 %v461
          %645 = vmatpush.msra.mxu0 %v453
          %646 = vmatpush.msra.mxu0 %v445
          %647 = vmatpush.msra.mxu0 %v437
          %648 = vmatpush.msra.mxu0 %v429
          %649 = vmatmul.f32.gmra.mxu0 %v424
          %v650 = vpop.f32.mrf.mxu0
          %v651 = vadd.f32 0.0, %v650
          %652 = vdwg.mxu0
          %653 = vmatpush.msra.mxu0 %v550
          %654 = vmatpush.msra.mxu0 %v542
          %655 = vmatpush.msra.mxu0 %v534
          %656 = vmatpush.msra.mxu0 %v526
          %657 = vmatpush.msra.mxu0 %v518
          %658 = vmatpush.msra.mxu0 %v510
          %659 = vmatpush.msra.mxu0 %v502
          %660 = vmatpush.msra.mxu0 %v494
          %661 = vmatpush.msra.mxu0 %v486
          %662 = vmatpush.msra.mxu0 %v478
          %663 = vmatpush.msra.mxu0 %v470
          %664 = vmatpush.msra.mxu0 %v462
          %665 = vmatpush.msra.mxu0 %v454
          %666 = vmatpush.msra.mxu0 %v446
          %667 = vmatpush.msra.mxu0 %v438
          %668 = vmatpush.msra.mxu0 %v430
          %669 = vmatmul.f32.gmra.mxu0 %v424
          %v670 = vpop.f32.mrf.mxu0
          %v671 = vadd.f32 0.0, %v670
          %672 = vdwg.mxu0
          %673 = vmatpush.msra.mxu0 %v551
          %674 = vmatpush.msra.mxu0 %v543
          %675 = vmatpush.msra.mxu0 %v535
          %676 = vmatpush.msra.mxu0 %v527
          %677 = vmatpush.msra.mxu0 %v519
          %678 = vmatpush.msra.mxu0 %v511
          %679 = vmatpush.msra.mxu0 %v503
          %680 = vmatpush.msra.mxu0 %v495
          %681 = vmatpush.msra.mxu0 %v487
          %682 = vmatpush.msra.mxu0 %v479
          %683 = vmatpush.msra.mxu0 %v471
          %684 = vmatpush.msra.mxu0 %v463
          %685 = vmatpush.msra.mxu0 %v455
          %686 = vmatpush.msra.mxu0 %v447
          %687 = vmatpush.msra.mxu0 %v439
          %688 = vmatpush.msra.mxu0 %v431
          %689 = vmatmul.f32.gmra.mxu0 %v424
          %v690 = vpop.f32.mrf.mxu0
          %v691 = vadd.f32 0.0, %v690
          %692 = vdwg.mxu0
          %693 = vmatpush.msra.mxu0 %v552
          %694 = vmatpush.msra.mxu0 %v544
          %695 = vmatpush.msra.mxu0 %v536
          %696 = vmatpush.msra.mxu0 %v528
          %697 = vmatpush.msra.mxu0 %v520
          %698 = vmatpush.msra.mxu0 %v512
          %699 = vmatpush.msra.mxu0 %v504
          %700 = vmatpush.msra.mxu0 %v496
          %701 = vmatpush.msra.mxu0 %v488
          %702 = vmatpush.msra.mxu0 %v480
          %703 = vmatpush.msra.mxu0 %v472
          %704 = vmatpush.msra.mxu0 %v464
          %705 = vmatpush.msra.mxu0 %v456
          %706 = vmatpush.msra.mxu0 %v448
          %707 = vmatpush.msra.mxu0 %v440
          %708 = vmatpush.msra.mxu0 %v432
          %709 = vmatmul.f32.gmra.mxu0 %v424
          %v710 = vpop.f32.mrf.mxu0
          %v711 = vadd.f32 0.0, %v710
          %712 = vdwg.mxu0
          %v713 = vmax.f32 %v571, 0.0
          %v714 = vmax.f32 %v591, 0.0
          %v715 = vmax.f32 %v611, 0.0
          %v716 = vmax.f32 %v631, 0.0
          %v717 = vmax.f32 %v651, 0.0
          %v718 = vmax.f32 %v671, 0.0
          %v719 = vmax.f32 %v691, 0.0
          %v720 = vmax.f32 %v711, 0.0
          %v721 = vadd.s32 %v422, 128
          %v722 = vadd.s32 %v422, 256
          %v723 = vadd.s32 %v422, 384
          %v724 = vadd.s32 %v422, 512
          %v725 = vadd.s32 %v422, 640
          %v726 = vadd.s32 %v422, 768
          %v727 = vadd.s32 %v422, 896
          %vm728 = vcmp.eq.s32.totalorder %v422, 1023
          %vm729 = vcmp.eq.s32.totalorder %v721, 1023
          %vm730 = vcmp.eq.s32.totalorder %v722, 1023
          %vm731 = vcmp.eq.s32.totalorder %v723, 1023
          %vm732 = vcmp.eq.s32.totalorder %v724, 1023
          %vm733 = vcmp.eq.s32.totalorder %v725, 1023
          %vm734 = vcmp.eq.s32.totalorder %v726, 1023
          %vm735 = vcmp.eq.s32.totalorder %v727, 1023
          %v736 = vsel %vm728, 1.0, %v713
          %v737 = vsel %vm729, 1.0, %v714
          %v738 = vsel %vm730, 1.0, %v715
          %v739 = vsel %vm731, 1.0, %v716
          %v740 = vsel %vm732, 1.0, %v717
          %v741 = vsel %vm733, 1.0, %v718
          %v742 = vsel %vm734, 1.0, %v719
          %v743 = vsel %vm735, 1.0, %v720
          %v744 = vld [vmem:[%s3] sm:$0xff]
          %v745 = vld [vmem:[%s3 + $0x8] sm:$0xff]
          %v746 = vld [vmem:[%s3 + $0x10] sm:$0xff]
          %v747 = vld [vmem:[%s3 + $0x18] sm:$0xff]
          %v748 = vld [vmem:[%s3 + $0x20] sm:$0xff]
          %v749 = vld [vmem:[%s3 + $0x28] sm:$0xff]
          %v750 = vld [vmem:[%s3 + $0x30] sm:$0xff]
          %v751 = vld [vmem:[%s3 + $0x38] sm:$0xff]
          %v752 = vld [vmem:[%s3 + $0x40] sm:$0xff]
          %v753 = vld [vmem:[%s3 + $0x48] sm:$0xff]
          %v754 = vld [vmem:[%s3 + $0x50] sm:$0xff]
          %v755 = vld [vmem:[%s3 + $0x58] sm:$0xff]
          %v756 = vld [vmem:[%s3 + $0x60] sm:$0xff]
          %v757 = vld [vmem:[%s3 + $0x68] sm:$0xff]
          %v758 = vld [vmem:[%s3 + $0x70] sm:$0xff]
          %v759 = vld [vmem:[%s3 + $0x78] sm:$0xff]
          %v760 = vld [vmem:[%s3 + $0x80] sm:$0xff]
          %v761 = vld [vmem:[%s3 + $0x88] sm:$0xff]
          %v762 = vld [vmem:[%s3 + $0x90] sm:$0xff]
          %v763 = vld [vmem:[%s3 + $0x98] sm:$0xff]
          %v764 = vld [vmem:[%s3 + $0xa0] sm:$0xff]
          %v765 = vld [vmem:[%s3 + $0xa8] sm:$0xff]
          %v766 = vld [vmem:[%s3 + $0xb0] sm:$0xff]
          %v767 = vld [vmem:[%s3 + $0xb8] sm:$0xff]
          %v768 = vld [vmem:[%s3 + $0xc0] sm:$0xff]
          %v769 = vld [vmem:[%s3 + $0xc8] sm:$0xff]
          %v770 = vld [vmem:[%s3 + $0xd0] sm:$0xff]
          %v771 = vld [vmem:[%s3 + $0xd8] sm:$0xff]
          %v772 = vld [vmem:[%s3 + $0xe0] sm:$0xff]
          %v773 = vld [vmem:[%s3 + $0xe8] sm:$0xff]
          %v774 = vld [vmem:[%s3 + $0xf0] sm:$0xff]
          %v775 = vld [vmem:[%s3 + $0xf8] sm:$0xff]
          %v776 = vld [vmem:[%s3 + $0x100] sm:$0xff]
          %v777 = vld [vmem:[%s3 + $0x108] sm:$0xff]
          %v778 = vld [vmem:[%s3 + $0x110] sm:$0xff]
          %v779 = vld [vmem:[%s3 + $0x118] sm:$0xff]
          %v780 = vld [vmem:[%s3 + $0x120] sm:$0xff]
          %v781 = vld [vmem:[%s3 + $0x128] sm:$0xff]
          %v782 = vld [vmem:[%s3 + $0x130] sm:$0xff]
          %v783 = vld [vmem:[%s3 + $0x138] sm:$0xff]
          %v784 = vld [vmem:[%s3 + $0x140] sm:$0xff]
          %v785 = vld [vmem:[%s3 + $0x148] sm:$0xff]
          %v786 = vld [vmem:[%s3 + $0x150] sm:$0xff]
          %v787 = vld [vmem:[%s3 + $0x158] sm:$0xff]
          %v788 = vld [vmem:[%s3 + $0x160] sm:$0xff]
          %v789 = vld [vmem:[%s3 + $0x168] sm:$0xff]
          %v790 = vld [vmem:[%s3 + $0x170] sm:$0xff]
          %v791 = vld [vmem:[%s3 + $0x178] sm:$0xff]
          %v792 = vld [vmem:[%s3 + $0x180] sm:$0xff]
          %v793 = vld [vmem:[%s3 + $0x188] sm:$0xff]
          %v794 = vld [vmem:[%s3 + $0x190] sm:$0xff]
          %v795 = vld [vmem:[%s3 + $0x198] sm:$0xff]
          %v796 = vld [vmem:[%s3 + $0x1a0] sm:$0xff]
          %v797 = vld [vmem:[%s3 + $0x1a8] sm:$0xff]
          %v798 = vld [vmem:[%s3 + $0x1b0] sm:$0xff]
          %v799 = vld [vmem:[%s3 + $0x1b8] sm:$0xff]
          %v800 = vld [vmem:[%s3 + $0x1c0] sm:$0xff]
          %v801 = vld [vmem:[%s3 + $0x1c8] sm:$0xff]
          %v802 = vld [vmem:[%s3 + $0x1d0] sm:$0xff]
          %v803 = vld [vmem:[%s3 + $0x1d8] sm:$0xff]
          %v804 = vld [vmem:[%s3 + $0x1e0] sm:$0xff]
          %v805 = vld [vmem:[%s3 + $0x1e8] sm:$0xff]
          %v806 = vld [vmem:[%s3 + $0x1f0] sm:$0xff]
          %v807 = vld [vmem:[%s3 + $0x1f8] sm:$0xff]
          %v808 = vld [vmem:[%s3 + $0x200] sm:$0xff]
          %v809 = vld [vmem:[%s3 + $0x208] sm:$0xff]
          %v810 = vld [vmem:[%s3 + $0x210] sm:$0xff]
          %v811 = vld [vmem:[%s3 + $0x218] sm:$0xff]
          %v812 = vld [vmem:[%s3 + $0x220] sm:$0xff]
          %v813 = vld [vmem:[%s3 + $0x228] sm:$0xff]
          %v814 = vld [vmem:[%s3 + $0x230] sm:$0xff]
          %v815 = vld [vmem:[%s3 + $0x238] sm:$0xff]
          %v816 = vld [vmem:[%s3 + $0x240] sm:$0xff]
          %v817 = vld [vmem:[%s3 + $0x248] sm:$0xff]
          %v818 = vld [vmem:[%s3 + $0x250] sm:$0xff]
          %v819 = vld [vmem:[%s3 + $0x258] sm:$0xff]
          %v820 = vld [vmem:[%s3 + $0x260] sm:$0xff]
          %v821 = vld [vmem:[%s3 + $0x268] sm:$0xff]
          %v822 = vld [vmem:[%s3 + $0x270] sm:$0xff]
          %v823 = vld [vmem:[%s3 + $0x278] sm:$0xff]
          %v824 = vld [vmem:[%s3 + $0x280] sm:$0xff]
          %v825 = vld [vmem:[%s3 + $0x288] sm:$0xff]
          %v826 = vld [vmem:[%s3 + $0x290] sm:$0xff]
          %v827 = vld [vmem:[%s3 + $0x298] sm:$0xff]
          %v828 = vld [vmem:[%s3 + $0x2a0] sm:$0xff]
          %v829 = vld [vmem:[%s3 + $0x2a8] sm:$0xff]
          %v830 = vld [vmem:[%s3 + $0x2b0] sm:$0xff]
          %v831 = vld [vmem:[%s3 + $0x2b8] sm:$0xff]
          %v832 = vld [vmem:[%s3 + $0x2c0] sm:$0xff]
          %v833 = vld [vmem:[%s3 + $0x2c8] sm:$0xff]
          %v834 = vld [vmem:[%s3 + $0x2d0] sm:$0xff]
          %v835 = vld [vmem:[%s3 + $0x2d8] sm:$0xff]
          %v836 = vld [vmem:[%s3 + $0x2e0] sm:$0xff]
          %v837 = vld [vmem:[%s3 + $0x2e8] sm:$0xff]
          %v838 = vld [vmem:[%s3 + $0x2f0] sm:$0xff]
          %v839 = vld [vmem:[%s3 + $0x2f8] sm:$0xff]
          %v840 = vld [vmem:[%s3 + $0x300] sm:$0xff]
          %v841 = vld [vmem:[%s3 + $0x308] sm:$0xff]
          %v842 = vld [vmem:[%s3 + $0x310] sm:$0xff]
          %v843 = vld [vmem:[%s3 + $0x318] sm:$0xff]
          %v844 = vld [vmem:[%s3 + $0x320] sm:$0xff]
          %v845 = vld [vmem:[%s3 + $0x328] sm:$0xff]
          %v846 = vld [vmem:[%s3 + $0x330] sm:$0xff]
          %v847 = vld [vmem:[%s3 + $0x338] sm:$0xff]
          %v848 = vld [vmem:[%s3 + $0x340] sm:$0xff]
          %v849 = vld [vmem:[%s3 + $0x348] sm:$0xff]
          %v850 = vld [vmem:[%s3 + $0x350] sm:$0xff]
          %v851 = vld [vmem:[%s3 + $0x358] sm:$0xff]
          %v852 = vld [vmem:[%s3 + $0x360] sm:$0xff]
          %v853 = vld [vmem:[%s3 + $0x368] sm:$0xff]
          %v854 = vld [vmem:[%s3 + $0x370] sm:$0xff]
          %v855 = vld [vmem:[%s3 + $0x378] sm:$0xff]
          %v856 = vld [vmem:[%s3 + $0x380] sm:$0xff]
          %v857 = vld [vmem:[%s3 + $0x388] sm:$0xff]
          %v858 = vld [vmem:[%s3 + $0x390] sm:$0xff]
          %v859 = vld [vmem:[%s3 + $0x398] sm:$0xff]
          %v860 = vld [vmem:[%s3 + $0x3a0] sm:$0xff]
          %v861 = vld [vmem:[%s3 + $0x3a8] sm:$0xff]
          %v862 = vld [vmem:[%s3 + $0x3b0] sm:$0xff]
          %v863 = vld [vmem:[%s3 + $0x3b8] sm:$0xff]
          %v864 = vld [vmem:[%s3 + $0x3c0] sm:$0xff]
          %v865 = vld [vmem:[%s3 + $0x3c8] sm:$0xff]
          %v866 = vld [vmem:[%s3 + $0x3d0] sm:$0xff]
          %v867 = vld [vmem:[%s3 + $0x3d8] sm:$0xff]
          %v868 = vld [vmem:[%s3 + $0x3e0] sm:$0xff]
          %v869 = vld [vmem:[%s3 + $0x3e8] sm:$0xff]
          %v870 = vld [vmem:[%s3 + $0x3f0] sm:$0xff]
          %v871 = vld [vmem:[%s3 + $0x3f8] sm:$0xff]
          %872 = vmatpush.msra.mxu0 %v759
          %873 = vmatpush.msra.mxu0 %v758
          %874 = vmatpush.msra.mxu0 %v757
          %875 = vmatpush.msra.mxu0 %v756
          %876 = vmatpush.msra.mxu0 %v755
          %877 = vmatpush.msra.mxu0 %v754
          %878 = vmatpush.msra.mxu0 %v753
          %879 = vmatpush.msra.mxu0 %v752
          %880 = vmatpush.msra.mxu0 %v751
          %881 = vmatpush.msra.mxu0 %v750
          %882 = vmatpush.msra.mxu0 %v749
          %883 = vmatpush.msra.mxu0 %v748
          %884 = vmatpush.msra.mxu0 %v747
          %885 = vmatpush.msra.mxu0 %v746
          %886 = vmatpush.msra.mxu0 %v745
          %887 = vmatpush.msra.mxu0 %v744
          %888 = vmatmul.f32.gmra.mxu0 %v736
          %v889 = vpop.f32.mrf.mxu0
          %v890 = vadd.f32 0.0, %v889
          %891 = vdwg.mxu0
          %892 = vmatpush.msra.mxu0 %v775
          %893 = vmatpush.msra.mxu0 %v774
          %894 = vmatpush.msra.mxu0 %v773
          %895 = vmatpush.msra.mxu0 %v772
          %896 = vmatpush.msra.mxu0 %v771
          %897 = vmatpush.msra.mxu0 %v770
          %898 = vmatpush.msra.mxu0 %v769
          %899 = vmatpush.msra.mxu0 %v768
          %900 = vmatpush.msra.mxu0 %v767
          %901 = vmatpush.msra.mxu0 %v766
          %902 = vmatpush.msra.mxu0 %v765
          %903 = vmatpush.msra.mxu0 %v764
          %904 = vmatpush.msra.mxu0 %v763
          %905 = vmatpush.msra.mxu0 %v762
          %906 = vmatpush.msra.mxu0 %v761
          %907 = vmatpush.msra.mxu0 %v760
          %908 = vmatmul.f32.gmra.mxu0 %v737
          %v909 = vpop.f32.mrf.mxu0
          %v910 = vadd.f32 %v890, %v909
          %911 = vdwg.mxu0
          %912 = vmatpush.msra.mxu0 %v791
          %913 = vmatpush.msra.mxu0 %v790
          %914 = vmatpush.msra.mxu0 %v789
          %915 = vmatpush.msra.mxu0 %v788
          %916 = vmatpush.msra.mxu0 %v787
          %917 = vmatpush.msra.mxu0 %v786
          %918 = vmatpush.msra.mxu0 %v785
          %919 = vmatpush.msra.mxu0 %v784
          %920 = vmatpush.msra.mxu0 %v783
          %921 = vmatpush.msra.mxu0 %v782
          %922 = vmatpush.msra.mxu0 %v781
          %923 = vmatpush.msra.mxu0 %v780
          %924 = vmatpush.msra.mxu0 %v779
          %925 = vmatpush.msra.mxu0 %v778
          %926 = vmatpush.msra.mxu0 %v777
          %927 = vmatpush.msra.mxu0 %v776
          %928 = vmatmul.f32.gmra.mxu0 %v738
          %v929 = vpop.f32.mrf.mxu0
          %v930 = vadd.f32 %v910, %v929
          %931 = vdwg.mxu0
          %932 = vmatpush.msra.mxu0 %v807
          %933 = vmatpush.msra.mxu0 %v806
          %934 = vmatpush.msra.mxu0 %v805
          %935 = vmatpush.msra.mxu0 %v804
          %936 = vmatpush.msra.mxu0 %v803
          %937 = vmatpush.msra.mxu0 %v802
          %938 = vmatpush.msra.mxu0 %v801
          %939 = vmatpush.msra.mxu0 %v800
          %940 = vmatpush.msra.mxu0 %v799
          %941 = vmatpush.msra.mxu0 %v798
          %942 = vmatpush.msra.mxu0 %v797
          %943 = vmatpush.msra.mxu0 %v796
          %944 = vmatpush.msra.mxu0 %v795
          %945 = vmatpush.msra.mxu0 %v794
          %946 = vmatpush.msra.mxu0 %v793
          %947 = vmatpush.msra.mxu0 %v792
          %948 = vmatmul.f32.gmra.mxu0 %v739
          %v949 = vpop.f32.mrf.mxu0
          %v950 = vadd.f32 %v930, %v949
          %951 = vdwg.mxu0
          %952 = vmatpush.msra.mxu0 %v823
          %953 = vmatpush.msra.mxu0 %v822
          %954 = vmatpush.msra.mxu0 %v821
          %955 = vmatpush.msra.mxu0 %v820
          %956 = vmatpush.msra.mxu0 %v819
          %957 = vmatpush.msra.mxu0 %v818
          %958 = vmatpush.msra.mxu0 %v817
          %959 = vmatpush.msra.mxu0 %v816
          %960 = vmatpush.msra.mxu0 %v815
          %961 = vmatpush.msra.mxu0 %v814
          %962 = vmatpush.msra.mxu0 %v813
          %963 = vmatpush.msra.mxu0 %v812
          %964 = vmatpush.msra.mxu0 %v811
          %965 = vmatpush.msra.mxu0 %v810
          %966 = vmatpush.msra.mxu0 %v809
          %967 = vmatpush.msra.mxu0 %v808
          %968 = vmatmul.f32.gmra.mxu0 %v740
          %v969 = vpop.f32.mrf.mxu0
          %v970 = vadd.f32 %v950, %v969
          %971 = vdwg.mxu0
          %972 = vmatpush.msra.mxu0 %v839
          %973 = vmatpush.msra.mxu0 %v838
          %974 = vmatpush.msra.mxu0 %v837
          %975 = vmatpush.msra.mxu0 %v836
          %976 = vmatpush.msra.mxu0 %v835
          %977 = vmatpush.msra.mxu0 %v834
          %978 = vmatpush.msra.mxu0 %v833
          %979 = vmatpush.msra.mxu0 %v832
          %980 = vmatpush.msra.mxu0 %v831
          %981 = vmatpush.msra.mxu0 %v830
          %982 = vmatpush.msra.mxu0 %v829
          %983 = vmatpush.msra.mxu0 %v828
          %984 = vmatpush.msra.mxu0 %v827
          %985 = vmatpush.msra.mxu0 %v826
          %986 = vmatpush.msra.mxu0 %v825
          %987 = vmatpush.msra.mxu0 %v824
          %988 = vmatmul.f32.gmra.mxu0 %v741
          %v989 = vpop.f32.mrf.mxu0
          %v990 = vadd.f32 %v970, %v989
          %991 = vdwg.mxu0
          %992 = vmatpush.msra.mxu0 %v855
          %993 = vmatpush.msra.mxu0 %v854
          %994 = vmatpush.msra.mxu0 %v853
          %995 = vmatpush.msra.mxu0 %v852
          %996 = vmatpush.msra.mxu0 %v851
          %997 = vmatpush.msra.mxu0 %v850
          %998 = vmatpush.msra.mxu0 %v849
          %999 = vmatpush.msra.mxu0 %v848
          %1000 = vmatpush.msra.mxu0 %v847
          %1001 = vmatpush.msra.mxu0 %v846
          %1002 = vmatpush.msra.mxu0 %v845
          %1003 = vmatpush.msra.mxu0 %v844
          %1004 = vmatpush.msra.mxu0 %v843
          %1005 = vmatpush.msra.mxu0 %v842
          %1006 = vmatpush.msra.mxu0 %v841
          %1007 = vmatpush.msra.mxu0 %v840
          %1008 = vmatmul.f32.gmra.mxu0 %v742
          %v1009 = vpop.f32.mrf.mxu0
          %v1010 = vadd.f32 %v990, %v1009
          %1011 = vdwg.mxu0
          %1012 = vmatpush.msra.mxu0 %v871
          %1013 = vmatpush.msra.mxu0 %v870
          %1014 = vmatpush.msra.mxu0 %v869
          %1015 = vmatpush.msra.mxu0 %v868
          %1016 = vmatpush.msra.mxu0 %v867
          %1017 = vmatpush.msra.mxu0 %v866
          %1018 = vmatpush.msra.mxu0 %v865
          %1019 = vmatpush.msra.mxu0 %v864
          %1020 = vmatpush.msra.mxu0 %v863
          %1021 = vmatpush.msra.mxu0 %v862
          %1022 = vmatpush.msra.mxu0 %v861
          %1023 = vmatpush.msra.mxu0 %v860
          %1024 = vmatpush.msra.mxu0 %v859
          %1025 = vmatpush.msra.mxu0 %v858
          %1026 = vmatpush.msra.mxu0 %v857
          %1027 = vmatpush.msra.mxu0 %v856
          %1028 = vmatmul.f32.gmra.mxu0 %v743
          %v1029 = vpop.f32.mrf.mxu0
          %v1030 = vadd.f32 %v1010, %v1029
          %1031 = vdwg.mxu0
          %1032 = vst [vmem:[%s212] sm:$0x1] %v1030
        $region44: #{cnn_forward.1} parent=35 // pred_fallthru
          _
        %s1033 = sand.u32 %s131, 1
        %s1034 = scalar_lea.sflag [#allocation4], %s1033
        %s1035 = sand.u32 %s131, 1
        %s1036 = scalar_lea.vmem [#allocation3], %s1035
        // Predicated region
        $region45: #{cnn_forward.1} parent=35 // pred_check
          %p1037 = pneg %p141
        $region46: #{cnn_forward.1} parent=35 // pred_check_branch
          %1039 = sbr.rel (%p1037) target = $region48
        $region47: #{cnn_forward.1} parent=35 // pred_region
          %1041 = vsyncadd %s1034, 0
          %s1042 = scalar_lea.hbm %s4, %s22
          %s1044 = sshll.u32 %s1036, 4
          %s1045 = int_to_ptr.vmem [resolvable:$true] %s1044
          %s1046 = sshll.u32 %s1042, 4
          %s1047 = int_to_ptr.hbm [resolvable:$true] %s1046
          %1049 = dma.vmem_to_hbm [thread:$0]  %s1045, 16, %s1047, %s1034
        $region48: #{cnn_forward.1} parent=35 // pred_fallthru
          _
      $region36: #{cnn_forward.1} parent=5 // pred_fallthru
        _
      %p1050 = scmp.le.s32.totalorder 2, %s13
      // Predicated region
      $region49: #{cnn_forward.1} parent=5 // pred_check
        %p1051 = pneg %p1050
      $region50: #{cnn_forward.1} parent=5 // pred_check_branch
        %1053 = sbr.rel (%p1051) target = $region52
      $region51: #{cnn_forward.1} parent=5 // pred_region
        %s1054 = ssub.s32 %s13, 2
        // Predicated region
        $region53: #{cnn_forward.1} parent=51 // pred_check
          %p1055 = pneg %p147
        $region54: #{cnn_forward.1} parent=51 // pred_check_branch
          %1057 = sbr.rel (%p1055) target = $region56
        $region55: #{cnn_forward.1} parent=51 // pred_region
          %s1058 = sand.u32 %s132, 1
          %s1059 = scalar_lea.sflag [#allocation4], %s1058
          %s1060 = sand.u32 %s132, 1
          %s1061 = scalar_lea.vmem [#allocation3], %s1060
          %1063 = dma.done %s1059, 16
        $region56: #{cnn_forward.1} parent=51 // pred_fallthru
          _
      $region52: #{cnn_forward.1} parent=5 // pred_fallthru
        _
    $region6: #{cnn_forward.1} parent=1 // loop_footer
      %s17 = sadd.s32 1, %s13
    $region7: #{cnn_forward.1} parent=1 // loop_footer_branch
      %12 = sbr.rel target = $region3
    $region8: #{cnn_forward.1} parent=1 // loop_exit
      _
    %1064 = vsyncpa [#allocation4], 1
    %s1065 = scalar_lea.sflag [#allocation4], 1
    %1066 = vsyncpa %s1065, 1

</llo_original>
